<compile_context>
chip_gen: v5e
topology: v5e:2x2
jax: 0.10.0
libtpu: 0.0.40
codegen_flags: <defaults>
</compile_context>

<pallas_src>
import math

import jax
import jax.numpy as jnp
from jax import lax
from jax.experimental import pallas as pl
from jax.experimental.pallas import tpu as pltpu

EPS = 1e-5  # nn.LayerNorm default


def _patch_merge_kernel(x_ref, we_ref, wo_ref, b_ref, o_ref):
    """Fused 2x2 gather + LayerNorm + channel reduction for one row tile.

    x_ref : (tp, 2, W2, 2C)  h-parity 0 = even rows -> [x0 | x2],
                             h-parity 1 = odd  rows -> [x1 | x3]
    we_ref: (2C, 2C)  gamma-folded reduction weight rows for the even half
    wo_ref: (2C, 2C)  gamma-folded reduction weight rows for the odd half
    b_ref : (1, 2C)   beta @ W_t (f32)
    o_ref : (tm, 2C)  tm = tp * W2
    """
    tp, _, w2, c2 = x_ref.shape
    tm = tp * w2

    xt = x_ref[...]
    # Two (tm, 2C) parity halves; the (tm, 4C) concat is never materialized.
    # (The reshape is layout-trivial when W2 % 8 == 0.)
    xe = xt[:, 0, :, :].astype(jnp.float32).reshape(tm, c2)   # [x0 | x2]
    xo = xt[:, 1, :, :].astype(jnp.float32).reshape(tm, c2)   # [x1 | x3]

    # LayerNorm statistics over the full 4C vector (f32), uncentered form, so
    # no centered 4C-wide temp is built.
    inv_c4 = 1.0 / (2.0 * c2)
    s = jnp.sum(xe, axis=-1, keepdims=True) + jnp.sum(xo, axis=-1, keepdims=True)
    sq = (jnp.sum(xe * xe, axis=-1, keepdims=True)
          + jnp.sum(xo * xo, axis=-1, keepdims=True))
    mean = s * inv_c4
    var = jnp.maximum(sq * inv_c4 - mean * mean, 0.0)  # clamp keeps padded rows finite
    rstd = lax.rsqrt(var + EPS)

    xne = ((xe - mean) * rstd).astype(we_ref.dtype)
    xno = ((xo - mean) * rstd).astype(wo_ref.dtype)

    # Two accumulating MXU matmuls replace the single 4C-wide one (kernel is
    # HBM-bound, so the extra MXU pass is free while the VMEM shrinks ~2x).
    y = jnp.dot(xne, we_ref[...], preferred_element_type=jnp.float32)
    y = y + jnp.dot(xno, wo_ref[...], preferred_element_type=jnp.float32)
    y = y + b_ref[...].astype(jnp.float32)
    o_ref[...] = y.astype(o_ref.dtype)


def _vmem_budgets():
    """Generation-aware (per-step working-set budget, vmem_limit_bytes)."""
    cap = None
    try:
        cap = getattr(pltpu.get_tpu_info(), "vmem_capacity_bytes", None)
    except Exception:
        cap = None
    if cap is None or cap <= 64 * 2**20:       # v7x (64 MiB / TC) or unknown
        return 24 * 2**20, 32 * 2**20
    return 40 * 2**20, 64 * 2**20              # v5e / v6e (128 MiB physical)


def _choose_tp(P, W2, C, in_isz, out_isz, mxu_isz, target_rows, vmem_budget):
    """How many merged rows (W2 output positions each) to process per step."""
    mult = 8 // math.gcd(W2, 8)   # keeps the (tp*W2, 2C) output block 8-sublane aligned

    def step_bytes(tp):
        tm = tp * W2
        io = 2 * tm * 4 * C * in_isz + 2 * tm * 2 * C * out_isz   # double-buffered DMA
        work = 2 * tm * 2 * C * 4                                 # xe / xo f32 upcasts
        work += 2 * tm * 2 * C * mxu_isz                          # xne / xno MXU operands
        work += tm * 2 * C * 4                                    # f32 accumulator
        return io + work

    tp = max(mult, target_rows // max(W2, 1))
    while tp > mult and step_bytes(tp) > vmem_budget:
        tp = max(mult, tp // 2)
    # >= 4 grid steps when P permits: 2 TensorCores (v7x) x >= 2 steps each so
    # the BlockSpec double buffer can overlap DMA with compute on both cores.
    min_steps = 4
    if P >= min_steps * mult and -(-P // tp) < min_steps:
        tp = -(-P // min_steps)
    tp = max(mult, (tp // mult) * mult)
    return max(1, min(tp, P))


def patch_merging(x, input_resolution, gamma, beta, w_reduction, *,
                  mxu_dtype=jnp.bfloat16, target_rows=None):
    """Pallas implementation of PatchMerging.forward.

    x:            (B, H*W, C)   (f32 or bf16; output dtype follows x)
    gamma, beta:  (4C,)   LayerNorm weight / bias
    w_reduction:  (2C, 4C) torch-layout Linear weight (no bias)
    returns:      (B, H/2 * W/2, 2C)
    """
    H, W = input_resolution
    B, L, C = x.shape
    assert L == H * W, "input feature has wrong size"
    assert H % 2 == 0 and W % 2 == 0, f"x size ({H}*{W}) are not even."

    H2, W2 = H // 2, W // 2
    P = B * H2                      # merged rows
    N = P * W2                      # output positions
    C2 = 2 * C

    # Free contiguous reshape: (B, H*W, C) -> (P, h-parity, W2, 2C).
    x4 = x.reshape(P, 2, W2, C2)

    # Fold the LayerNorm affine into the reduction weight/bias, and split the
    # folded weight into the rows consumed by the even ([x0|x2]) and odd
    # ([x1|x3]) parity halves so the (N, 4C) tensor never exists anywhere.
    w_t = w_reduction.astype(jnp.float32).T                  # (4C, 2C) rows = [x0,x1,x2,x3]
    w_fold = gamma.astype(jnp.float32)[:, None] * w_t
    w_even = jnp.concatenate([w_fold[0:C], w_fold[2 * C:3 * C]], axis=0).astype(mxu_dtype)
    w_odd = jnp.concatenate([w_fold[C:2 * C], w_fold[3 * C:4 * C]], axis=0).astype(mxu_dtype)
    b_fold = (beta.astype(jnp.float32) @ w_t).reshape(1, C2)

    in_isz = jnp.dtype(x.dtype).itemsize
    mxu_isz = jnp.dtype(mxu_dtype).itemsize
    step_budget, vmem_limit = _vmem_budgets()
    if target_rows is None:
        target_rows = 1024 if vmem_limit <= 32 * 2**20 else 2048
    tp = _choose_tp(P, W2, C, in_isz, in_isz, mxu_isz, target_rows, step_budget)
    tm = tp * W2
    grid = (pl.cdiv(P, tp),)        # no divisibility requirement on P

    cost = pl.CostEstimate(
        flops=2 * N * (4 * C) * C2 + 8 * N * (4 * C),
        transcendentals=N,
        bytes_accessed=(P * 2 * W2 * C2 * in_isz          # input
                        + 2 * C2 * C2 * mxu_isz           # resident weights
                        + N * C2 * in_isz))               # output

    out = pl.pallas_call(
        _patch_merge_kernel,
        out_shape=jax.ShapeDtypeStruct((N, C2), x.dtype),
        grid_spec=pltpu.PrefetchScalarGridSpec(
            num_scalar_prefetch=0,
            grid=grid,
            in_specs=[
                pl.BlockSpec((tp, 2, W2, C2), lambda i: (i, 0, 0, 0)),
                pl.BlockSpec((C2, C2), lambda i: (0, 0)),   # resident even weight
                pl.BlockSpec((C2, C2), lambda i: (0, 0)),   # resident odd weight
                pl.BlockSpec((1, C2), lambda i: (0, 0)),    # resident bias
            ],
            out_specs=pl.BlockSpec((tm, C2), lambda i: (i, 0)),
        ),
        compiler_params=pltpu.CompilerParams(
            dimension_semantics=("parallel",),
            vmem_limit_bytes=vmem_limit),
        cost_estimate=cost,
    )(x4, w_even, w_odd, b_fold)

    return out.reshape(B, H2 * W2, C2)


def _reference(x, input_resolution, gamma, beta, w_reduction):
    """Pure-JAX reference mirroring the torch forward (f32 math)."""
    H, W = input_resolution
    B, L, C = x.shape
    xg = x.reshape(B, H, W, C)
    x0 = xg[:, 0::2, 0::2, :]
    x1 = xg[:, 1::2, 0::2, :]
    x2 = xg[:, 0::2, 1::2, :]
    x3 = xg[:, 1::2, 1::2, :]
    xm = jnp.concatenate([x0, x1, x2, x3], axis=-1).reshape(B, -1, 4 * C)
    xm = xm.astype(jnp.float32)
    mean = jnp.mean(xm, axis=-1, keepdims=True)
    var = jnp.mean((xm - mean) ** 2, axis=-1, keepdims=True)
    xn = (xm - mean) / jnp.sqrt(var + EPS) * gamma + beta
    y = jnp.einsum("bld,od->blo", xn, w_reduction.astype(jnp.float32))
    return y


if __name__ == "__main__":
    # Small shapes consistent with the module: B=2, H=W=16, C=64
    # (C=64 keeps 2C=128 lane-dense on TPU; W2=8 keeps reshapes layout-trivial).
    B, H, W, C = 2, 16, 16, 64
    key = jax.random.PRNGKey(0)
    kx, kw, kg, kb = jax.random.split(key, 4)

    x = jax.random.normal(kx, (B, H * W, C), dtype=jnp.float32)
    gamma = 1.0 + 0.1 * jax.random.normal(kg, (4 * C,), dtype=jnp.float32)
    beta = 0.1 * jax.random.normal(kb, (4 * C,), dtype=jnp.float32)
    w_reduction = (jax.random.normal(kw, (2 * C, 4 * C), dtype=jnp.float32)
                   * (1.0 / jnp.sqrt(4.0 * C)))

    out_shape = (B, (H // 2) * (W // 2), 2 * C)

    # f32 end-to-end (tight check against the pure-JAX reference).
    ref = _reference(x, (H, W), gamma, beta, w_reduction)
    out_f32 = jax.block_until_ready(
        patch_merging(x, (H, W), gamma, beta, w_reduction, mxu_dtype=jnp.float32))
    assert out_f32.shape == out_shape, out_f32.shape
    assert jnp.allclose(out_f32, ref, atol=2e-3, rtol=2e-3), float(
        jnp.max(jnp.abs(out_f32 - ref)))

    # Production path: bf16 activations in/out + bf16 MXU (HBM-bound win).
    x_bf16 = x.astype(jnp.bfloat16)
    ref_bf16 = _reference(x_bf16.astype(jnp.float32), (H, W), gamma, beta, w_reduction)
    out_bf16 = jax.block_until_ready(
        patch_merging(x_bf16, (H, W), gamma, beta, w_reduction))
    assert out_bf16.shape == out_shape, out_bf16.shape
    assert out_bf16.dtype == jnp.bfloat16, out_bf16.dtype
    assert jnp.allclose(out_bf16.astype(jnp.float32), ref_bf16,
                        atol=7.5e-2, rtol=5e-2), float(
        jnp.max(jnp.abs(out_bf16.astype(jnp.float32) - ref_bf16)))

    print("KERNEL_OK")
</pallas_src>

<mosaic_0001>
module attributes {stable_mosaic.version = 11 : i64} {
  func.func @_patch_merge_kernel(%arg0: i32, %arg1: memref<4x2x8x128xf32, #tpu.memory_space<vmem>>, %arg2: memref<128x128xf32, #tpu.memory_space<vmem>>, %arg3: memref<128x128xf32, #tpu.memory_space<vmem>>, %arg4: memref<1x128xf32, #tpu.memory_space<vmem>>, %arg5: memref<32x128xf32, #tpu.memory_space<vmem>>) attributes {dimension_semantics = [#tpu.dimension_semantics<parallel>], iteration_bounds = array<i64: 4>, scalar_prefetch = 0 : i64, scratch_operands = 0 : i64, tpu.core_type = #tpu.core_type<tc>, window_params = [{transform_indices = @transform_0, window_bounds = array<i64: 4, 2, 8, 128>}, {pipeline_mode = #tpu.pipeline_mode<synchronous>, transform_indices = @transform_1, window_bounds = array<i64: 128, 128>}, {pipeline_mode = #tpu.pipeline_mode<synchronous>, transform_indices = @transform_2, window_bounds = array<i64: 128, 128>}, {pipeline_mode = #tpu.pipeline_mode<synchronous>, transform_indices = @transform_3, window_bounds = array<i64: 1, 128>}, {transform_indices = @transform_4, window_bounds = array<i64: 32, 128>}]} {
    %c0 = arith.constant 0 : index
    %c0_0 = arith.constant 0 : index
    %c0_1 = arith.constant 0 : index
    %c0_2 = arith.constant 0 : index
    %0 = vector.load %arg1[%c0, %c0_0, %c0_1, %c0_2] : memref<4x2x8x128xf32, #tpu.memory_space<vmem>>, vector<4x2x8x128xf32>
    %1 = vector.extract_strided_slice %0 {offsets = [0, 0, 0, 0], sizes = [4, 1, 8, 128], strides = [1, 1, 1, 1]} : vector<4x2x8x128xf32> to vector<4x1x8x128xf32>
    %2 = vector.shape_cast %1 : vector<4x1x8x128xf32> to vector<4x8x128xf32>
    %3 = vector.shape_cast %2 : vector<4x8x128xf32> to vector<32x128xf32>
    %4 = vector.extract_strided_slice %0 {offsets = [0, 1, 0, 0], sizes = [4, 1, 8, 128], strides = [1, 1, 1, 1]} : vector<4x2x8x128xf32> to vector<4x1x8x128xf32>
    %5 = vector.shape_cast %4 : vector<4x1x8x128xf32> to vector<4x8x128xf32>
    %6 = vector.shape_cast %5 : vector<4x8x128xf32> to vector<32x128xf32>
    %cst = arith.constant dense<0.000000e+00> : vector<32xf32>
    %7 = vector.multi_reduction <add>, %3, %cst [1] : vector<32x128xf32> to vector<32xf32>
    %8 = vector.shape_cast %7 : vector<32xf32> to vector<32x1xf32>
    %cst_3 = arith.constant dense<0.000000e+00> : vector<32xf32>
    %9 = vector.multi_reduction <add>, %6, %cst_3 [1] : vector<32x128xf32> to vector<32xf32>
    %10 = vector.shape_cast %9 : vector<32xf32> to vector<32x1xf32>
    %11 = arith.addf %8, %10 : vector<32x1xf32>
    %12 = arith.mulf %3, %3 : vector<32x128xf32>
    %cst_4 = arith.constant dense<0.000000e+00> : vector<32xf32>
    %13 = vector.multi_reduction <add>, %12, %cst_4 [1] : vector<32x128xf32> to vector<32xf32>
    %14 = vector.shape_cast %13 : vector<32xf32> to vector<32x1xf32>
    %15 = arith.mulf %6, %6 : vector<32x128xf32>
    %cst_5 = arith.constant dense<0.000000e+00> : vector<32xf32>
    %16 = vector.multi_reduction <add>, %15, %cst_5 [1] : vector<32x128xf32> to vector<32xf32>
    %17 = vector.shape_cast %16 : vector<32xf32> to vector<32x1xf32>
    %18 = arith.addf %14, %17 : vector<32x1xf32>
    %cst_6 = arith.constant 3.906250e-03 : f32
    %19 = vector.broadcast %cst_6 : f32 to vector<32x1xf32>
    %20 = arith.mulf %11, %19 : vector<32x1xf32>
    %cst_7 = arith.constant 3.906250e-03 : f32
    %21 = vector.broadcast %cst_7 : f32 to vector<32x1xf32>
    %22 = arith.mulf %18, %21 : vector<32x1xf32>
    %23 = arith.mulf %20, %20 : vector<32x1xf32>
    %24 = arith.subf %22, %23 : vector<32x1xf32>
    %cst_8 = arith.constant 0.000000e+00 : f32
    %25 = vector.broadcast %cst_8 : f32 to vector<32x1xf32>
    %26 = arith.maximumf %24, %25 : vector<32x1xf32>
    %cst_9 = arith.constant 9.99999974E-6 : f32
    %27 = vector.broadcast %cst_9 : f32 to vector<32x1xf32>
    %28 = arith.addf %26, %27 : vector<32x1xf32>
    %29 = math.rsqrt %28 : vector<32x1xf32>
    %30 = vector.broadcast %20 : vector<32x1xf32> to vector<32x128xf32>
    %31 = arith.subf %3, %30 : vector<32x128xf32>
    %32 = vector.broadcast %29 : vector<32x1xf32> to vector<32x128xf32>
    %33 = arith.mulf %31, %32 : vector<32x128xf32>
    %34 = vector.broadcast %20 : vector<32x1xf32> to vector<32x128xf32>
    %35 = arith.subf %6, %34 : vector<32x128xf32>
    %36 = vector.broadcast %29 : vector<32x1xf32> to vector<32x128xf32>
    %37 = arith.mulf %35, %36 : vector<32x128xf32>
    %c0_10 = arith.constant 0 : index
    %c0_11 = arith.constant 0 : index
    %38 = vector.load %arg2[%c0_10, %c0_11] : memref<128x128xf32, #tpu.memory_space<vmem>>, vector<128x128xf32>
    %cst_12 = arith.constant dense<0.000000e+00> : vector<32x128xf32>
    %39 = tpu.matmul %33, %38, %cst_12 {dimension_numbers = #tpu.dot_dimension_numbers<[1], [0], [0], [1], [0, 0, 1, 1], [], []>} : vector<32x128xf32>, vector<128x128xf32>, vector<32x128xf32> -> vector<32x128xf32>
    %c0_13 = arith.constant 0 : index
    %c0_14 = arith.constant 0 : index
    %40 = vector.load %arg3[%c0_13, %c0_14] : memref<128x128xf32, #tpu.memory_space<vmem>>, vector<128x128xf32>
    %cst_15 = arith.constant dense<0.000000e+00> : vector<32x128xf32>
    %41 = tpu.matmul %37, %40, %cst_15 {dimension_numbers = #tpu.dot_dimension_numbers<[1], [0], [0], [1], [0, 0, 1, 1], [], []>} : vector<32x128xf32>, vector<128x128xf32>, vector<32x128xf32> -> vector<32x128xf32>
    %42 = arith.addf %39, %41 : vector<32x128xf32>
    %c0_16 = arith.constant 0 : index
    %c0_17 = arith.constant 0 : index
    %43 = vector.load %arg4[%c0_16, %c0_17] : memref<1x128xf32, #tpu.memory_space<vmem>>, vector<1x128xf32>
    %44 = vector.broadcast %43 : vector<1x128xf32> to vector<32x128xf32>
    %45 = arith.addf %42, %44 : vector<32x128xf32>
    %c0_18 = arith.constant 0 : index
    %c0_19 = arith.constant 0 : index
    %46 = vector.load %arg5[%c0_18, %c0_19] : memref<32x128xf32, #tpu.memory_space<vmem>>, vector<32x128xf32>
    tpu.vector_store %arg5[%c0_18, %c0_19], %45 {strides = array<i32>} : memref<32x128xf32, #tpu.memory_space<vmem>>, vector<32x128xf32>,
    return
  }
  func.func @transform_0(%arg0: i32) -> (i32, i32, i32, i32) {
    %c0_i32 = arith.constant 0 : i32
    %c0_i32_0 = arith.constant 0 : i32
    %c0_i32_1 = arith.constant 0 : i32
    %c0_i32_2 = arith.constant 0 : i32
    return %arg0, %c0_i32, %c0_i32_0, %c0_i32_1 : i32, i32, i32, i32
  }
  func.func @transform_1(%arg0: i32) -> (i32, i32) {
    %c0_i32 = arith.constant 0 : i32
    %c0_i32_0 = arith.constant 0 : i32
    %c0_i32_1 = arith.constant 0 : i32
    return %c0_i32, %c0_i32_0 : i32, i32
  }
  func.func @transform_2(%arg0: i32) -> (i32, i32) {
    %c0_i32 = arith.constant 0 : i32
    %c0_i32_0 = arith.constant 0 : i32
    %c0_i32_1 = arith.constant 0 : i32
    return %c0_i32, %c0_i32_0 : i32, i32
  }
  func.func @transform_3(%arg0: i32) -> (i32, i32) {
    %c0_i32 = arith.constant 0 : i32
    %c0_i32_0 = arith.constant 0 : i32
    %c0_i32_1 = arith.constant 0 : i32
    return %c0_i32, %c0_i32_0 : i32, i32
  }
  func.func @transform_4(%arg0: i32) -> (i32, i32) {
    %c0_i32 = arith.constant 0 : i32
    %c0_i32_0 = arith.constant 0 : i32
    return %arg0, %c0_i32 : i32, i32
  }
}

</mosaic_0001>

<llo_original>
// kernel: tpu_custom_call.1
$region0: #{tpu_custom_call.1}
  #allocation0 [shape = 'u32[]', space=smem, size = 0x4, offset = 0x4, fixed_abs, tag = 'smem constant byte address 0x4 - core index']
  #allocation1 [shape = 'u32[72,128]{1,0:T(1,128)}', space=vmem, size = 0x9000, scoped, tag = 'internal scratch']
  %s0 = inlined_call_operand.hbm [shape: f32[16,2,8,128], index: 0, kind: input, shape index: {}]
  %s1 = inlined_call_operand.hbm [shape: f32[128,128], index: 1, kind: input, shape index: {}]
  %s2 = inlined_call_operand.hbm [shape: f32[128,128], index: 2, kind: input, shape index: {}]
  %s3 = inlined_call_operand.vmem [shape: f32[1,128], index: 3, kind: input, shape index: {}]
  %s4 = inlined_call_operand.hbm [shape: f32[128,128], index: 4, kind: output, shape index: {}]
  %s5 = sld [smem:[#allocation0]]
  $region61: #{tpu_custom_call.1} parent=0
    _
  %s7 = ssub.s32 1, %s5
  %s8 = scalar_select 0, %s7, %s5
  $region1: #{tpu_custom_call.1} parent=0
    #allocation2 [shape = 'u8[65536]{0}', space=vmem, size = 0x10000, scoped, tag = 'input window, operand 0']
    #allocation3 [shape = 's32[2]{0}', space=sflag, size = 0x8, scoped, tag = 'scoped memory for tpu_custom_call.1']
    #allocation4 [shape = 's32[2]{0}', space=sflag, size = 0x8, scoped, tag = 'scoped memory for tpu_custom_call.1']
    #allocation5 [shape = 'u8[65536]{0}', space=vmem, size = 0x10000, scoped, tag = 'input window, operand 1, single buffered']
    #allocation6 [shape = 's32[1]{0}', space=sflag, size = 0x4, scoped, tag = 'scoped memory for tpu_custom_call.1']
    #allocation7 [shape = 'u8[65536]{0}', space=vmem, size = 0x10000, scoped, tag = 'input window, operand 2, single buffered']
    #allocation8 [shape = 'u8[32768]{0}', space=vmem, size = 0x8000, scoped, tag = 'output window, operand 0']
    %9 = vsyncpa [#allocation3], 0
    %s10 = scalar_lea.sflag [#allocation3], 1
    %11 = vsyncpa %s10, 0
    %12 = vsyncpa [#allocation6], 0
    %13 = vsyncpa [#allocation4], 0
    %s14 = scalar_lea.sflag [#allocation4], 1
    %15 = vsyncpa %s14, 0
    loop: start=0, step=1, limit=6
    $region2: #{tpu_custom_call.1} parent=1 // loop_pre_header
      _
    $region3: #{tpu_custom_call.1} parent=1 // loop_header
      %s17 = sphi 0, %s21
      %p18 = scmp.ge.s32.totalorder %s17, 6
      %s27 = sphi 0, %s29
      %s30 = sphi 0, %s27
      %s31 = sphi 0, %s30
      %s47 = sphi 0, %s31
      %s51 = sphi 0, %s51
      %s53 = sphi 0, %s51
      %s54 = sphi 0, %s53
      %s68 = sphi 0, %s54
      %s72 = sphi 0, %s72
      %s74 = sphi 0, %s72
      %s75 = sphi 0, %s74
      %s89 = sphi 0, %s75
      %s93 = sphi 0, %s93
      %s95 = sphi 0, %s93
      %s96 = sphi 0, %s95
      %s110 = sphi 0, %s96
      %s116 = sphi 0, %s118
      %s119 = sphi 0, %s116
      %s120 = sphi 0, %s119
      %s136 = sphi 0, %s120
    $region4: #{tpu_custom_call.1} parent=1 // loop_header_branch
      %20 = sbr.rel (%p18) target = $region8
    $region5: #{tpu_custom_call.1} parent=1 // loop_body
      %s22 = ssub.s32 %s17, 1
      %s23 = ssub.s32 %s17, 2
      %s24 = sadd.s32 %s17, 1
      %s25 = ssub.s32 %s17, %s24
      %p26 = scmp.eq.s32.totalorder %s25, 0
      %s28 = sadd.s32 %s27, 1
      %s29 = scalar_select %p26, %s27, %s28
      %p32 = pneg %p26
      %p33 = scmp.eq.s32.totalorder %s17, 3
      %p34 = por %p32, %p33
      %p35 = scmp.ne.s32.totalorder %s27, %s30
      %p36 = scmp.eq.s32.totalorder %s17, 0
      %p37 = por %p35, %p36
      %p38 = scmp.ne.s32.totalorder %s27, %s30
      %p39 = scmp.eq.s32.totalorder %s22, 3
      %p40 = por %p38, %p39
      %p41 = scmp.ne.s32.totalorder %s30, %s31
      %p42 = scmp.eq.s32.totalorder %s22, 0
      %p43 = por %p41, %p42
      %p44 = scmp.ne.s32.totalorder %s30, %s31
      %p45 = scmp.eq.s32.totalorder %s23, 3
      %p46 = por %p44, %p45
      %p48 = scmp.ne.s32.totalorder %s31, %s47
      %p49 = scmp.eq.s32.totalorder %s23, 0
      %p50 = por %p48, %p49
      %s52 = sadd.s32 %s51, 1
      %p55 = scmp.eq.s32.totalorder %s17, 3
      %p56 = scmp.ne.s32.totalorder %s51, %s53
      %p57 = scmp.eq.s32.totalorder %s17, 0
      %p58 = por %p56, %p57
      %p59 = scmp.ne.s32.totalorder %s51, %s53
      %p60 = scmp.eq.s32.totalorder %s22, 3
      %p61 = por %p59, %p60
      %p62 = scmp.ne.s32.totalorder %s53, %s54
      %p63 = scmp.eq.s32.totalorder %s22, 0
      %p64 = por %p62, %p63
      %p65 = scmp.ne.s32.totalorder %s53, %s54
      %p66 = scmp.eq.s32.totalorder %s23, 3
      %p67 = por %p65, %p66
      %p69 = scmp.ne.s32.totalorder %s54, %s68
      %p70 = scmp.eq.s32.totalorder %s23, 0
      %p71 = por %p69, %p70
      %s73 = sadd.s32 %s72, 1
      %p76 = scmp.eq.s32.totalorder %s17, 3
      %p77 = scmp.ne.s32.totalorder %s72, %s74
      %p78 = scmp.eq.s32.totalorder %s17, 0
      %p79 = por %p77, %p78
      %p80 = scmp.ne.s32.totalorder %s72, %s74
      %p81 = scmp.eq.s32.totalorder %s22, 3
      %p82 = por %p80, %p81
      %p83 = scmp.ne.s32.totalorder %s74, %s75
      %p84 = scmp.eq.s32.totalorder %s22, 0
      %p85 = por %p83, %p84
      %p86 = scmp.ne.s32.totalorder %s74, %s75
      %p87 = scmp.eq.s32.totalorder %s23, 3
      %p88 = por %p86, %p87
      %p90 = scmp.ne.s32.totalorder %s75, %s89
      %p91 = scmp.eq.s32.totalorder %s23, 0
      %p92 = por %p90, %p91
      %s94 = sadd.s32 %s93, 1
      %p97 = scmp.eq.s32.totalorder %s17, 3
      %p98 = scmp.ne.s32.totalorder %s93, %s95
      %p99 = scmp.eq.s32.totalorder %s17, 0
      %p100 = por %p98, %p99
      %p101 = scmp.ne.s32.totalorder %s93, %s95
      %p102 = scmp.eq.s32.totalorder %s22, 3
      %p103 = por %p101, %p102
      %p104 = scmp.ne.s32.totalorder %s95, %s96
      %p105 = scmp.eq.s32.totalorder %s22, 0
      %p106 = por %p104, %p105
      %p107 = scmp.ne.s32.totalorder %s95, %s96
      %p108 = scmp.eq.s32.totalorder %s23, 3
      %p109 = por %p107, %p108
      %p111 = scmp.ne.s32.totalorder %s96, %s110
      %p112 = scmp.eq.s32.totalorder %s23, 0
      %p113 = por %p111, %p112
      %s114 = ssub.s32 %s17, %s24
      %p115 = scmp.eq.s32.totalorder %s114, 0
      %s117 = sadd.s32 %s116, 1
      %s118 = scalar_select %p115, %s116, %s117
      %p121 = pneg %p115
      %p122 = scmp.eq.s32.totalorder %s17, 3
      %p123 = por %p121, %p122
      %p124 = scmp.ne.s32.totalorder %s116, %s119
      %p125 = scmp.eq.s32.totalorder %s17, 0
      %p126 = por %p124, %p125
      %p127 = scmp.ne.s32.totalorder %s116, %s119
      %p128 = scmp.eq.s32.totalorder %s22, 3
      %p129 = por %p127, %p128
      %p130 = scmp.ne.s32.totalorder %s119, %s120
      %p131 = scmp.eq.s32.totalorder %s22, 0
      %p132 = por %p130, %p131
      %p133 = scmp.ne.s32.totalorder %s119, %s120
      %p134 = scmp.eq.s32.totalorder %s23, 3
      %p135 = por %p133, %p134
      %p137 = scmp.ne.s32.totalorder %s120, %s136
      %p138 = scmp.eq.s32.totalorder %s23, 0
      %p139 = por %p137, %p138
      %p140 = scmp.le.s32.totalorder 1, %s17
      %p141 = scmp.lt.s32.totalorder %s17, 5
      %p142 = pnand %p140, %p141
      %p143 = pneg %p142
      // Predicated region
      $region9: #{tpu_custom_call.1} parent=5 // pred_check
        _
      $region10: #{tpu_custom_call.1} parent=5 // pred_check_branch
        %145 = sbr.rel (%p142) target = $region12
      $region11: #{tpu_custom_call.1} parent=5 // pred_region
        %s146 = ssub.s32 %s17, 1
        // Predicated region
        $region13: #{tpu_custom_call.1} parent=11 // pred_check
          %p147 = pneg %p64
        $region14: #{tpu_custom_call.1} parent=11 // pred_check_branch
          %149 = sbr.rel (%p147) target = $region16
        $region15: #{tpu_custom_call.1} parent=11 // pred_region
          %151 = vsyncadd [#allocation6], 0
          %s152 = sshll.u32 %s1, 4
          %s153 = int_to_ptr.hbm [resolvable:$true] %s152
          %s154 = sshll.u32 [#allocation5], 4
          %s155 = int_to_ptr.vmem [resolvable:$true] %s154
          %160 = dma.hbm_to_vmem [thread:$0]  %s153, 2048, %s155, [#allocation6], 128, 128, 8
        $region16: #{tpu_custom_call.1} parent=11 // pred_fallthru
          _
        // Predicated region
        $region17: #{tpu_custom_call.1} parent=11 // pred_check
          %p161 = pneg %p85
        $region18: #{tpu_custom_call.1} parent=11 // pred_check_branch
          %163 = sbr.rel (%p161) target = $region20
        $region19: #{tpu_custom_call.1} parent=11 // pred_region
          %165 = vsyncadd [#allocation6], 0
          %s166 = sshll.u32 %s2, 4
          %s167 = int_to_ptr.hbm [resolvable:$true] %s166
          %s168 = sshll.u32 [#allocation7], 4
          %s169 = int_to_ptr.vmem [resolvable:$true] %s168
          %174 = dma.hbm_to_vmem [thread:$0]  %s167, 2048, %s169, [#allocation6], 128, 128, 8
        $region20: #{tpu_custom_call.1} parent=11 // pred_fallthru
          _
        // Predicated region
        $region21: #{tpu_custom_call.1} parent=11 // pred_check
          %p175 = pneg %p106
        $region22: #{tpu_custom_call.1} parent=11 // pred_check_branch
          %177 = sbr.rel (%p175) target = $region24
        $region23: #{tpu_custom_call.1} parent=11 // pred_region
          _
        $region24: #{tpu_custom_call.1} parent=11 // pred_fallthru
          _
      $region12: #{tpu_custom_call.1} parent=5 // pred_fallthru
        _
      %p178 = scmp.lt.s32.totalorder %s17, 4
      // Predicated region
      $region25: #{tpu_custom_call.1} parent=5 // pred_check
        %p179 = pneg %p178
      $region26: #{tpu_custom_call.1} parent=5 // pred_check_branch
        %181 = sbr.rel (%p179) target = $region28
      $region27: #{tpu_custom_call.1} parent=5 // pred_region
        // Predicated region
        $region29: #{tpu_custom_call.1} parent=27 // pred_check
          %p182 = pneg %p37
        $region30: #{tpu_custom_call.1} parent=27 // pred_check_branch
          %184 = sbr.rel (%p182) target = $region32
        $region31: #{tpu_custom_call.1} parent=27 // pred_region
          %s185 = sand.u32 %s27, 1
          %s186 = scalar_lea.sflag [#allocation3], %s185
          %s187 = sand.u32 %s27, 1
          %s188 = smul.addr %s187, 64
          %s189 = scalar_lea.vmem [#allocation2], %s188
          %s190 = smul.u32 4, %s17
          %192 = vsyncadd %s186, 0
          %s193 = smul.addr %s190, 2
          %s194 = smul.addr %s193, 8
          %s195 = scalar_lea.hbm %s0, %s194
          %s196 = sshll.u32 %s195, 4
          %s197 = int_to_ptr.hbm [resolvable:$true] %s196
          %s198 = sshll.u32 %s189, 4
          %s199 = int_to_ptr.vmem [resolvable:$true] %s198
          %204 = dma.hbm_to_vmem [thread:$0]  %s197, 1024, %s199, %s186, 128, 128, 8
        $region32: #{tpu_custom_call.1} parent=27 // pred_fallthru
          _
      $region28: #{tpu_custom_call.1} parent=5 // pred_fallthru
        _
      %p205 = scmp.le.s32.totalorder 1, %s17
      %p206 = scmp.lt.s32.totalorder %s17, 5
      %p207 = pnand %p205, %p206
      %p208 = pneg %p207
      // Predicated region
      $region33: #{tpu_custom_call.1} parent=5 // pred_check
        _
      $region34: #{tpu_custom_call.1} parent=5 // pred_check_branch
        %210 = sbr.rel (%p207) target = $region36
      $region35: #{tpu_custom_call.1} parent=5 // pred_region
        %s211 = ssub.s32 %s17, 1
        %s212 = sand.u32 %s30, 1
        %s213 = scalar_lea.sflag [#allocation3], %s212
        %s214 = sand.u32 %s30, 1
        %s215 = smul.addr %s214, 64
        %s216 = scalar_lea.vmem [#allocation2], %s215
        // Predicated region
        $region37: #{tpu_custom_call.1} parent=35 // pred_check
          %p217 = pneg %p43
        $region38: #{tpu_custom_call.1} parent=35 // pred_check_branch
          %219 = sbr.rel (%p217) target = $region40
        $region39: #{tpu_custom_call.1} parent=35 // pred_region
          %221 = dma.done %s213, 1024
        $region40: #{tpu_custom_call.1} parent=35 // pred_fallthru
          _
        // Predicated region
        $region41: #{tpu_custom_call.1} parent=35 // pred_check
          %p222 = pneg %p64
        $region42: #{tpu_custom_call.1} parent=35 // pred_check_branch
          %224 = sbr.rel (%p222) target = $region44
        $region43: #{tpu_custom_call.1} parent=35 // pred_region
          %226 = dma.done [#allocation6], 2048
        $region44: #{tpu_custom_call.1} parent=35 // pred_fallthru
          _
        // Predicated region
        $region45: #{tpu_custom_call.1} parent=35 // pred_check
          %p227 = pneg %p85
        $region46: #{tpu_custom_call.1} parent=35 // pred_check_branch
          %229 = sbr.rel (%p227) target = $region48
        $region47: #{tpu_custom_call.1} parent=35 // pred_region
          %231 = dma.done [#allocation6], 2048
        $region48: #{tpu_custom_call.1} parent=35 // pred_fallthru
          _
        %s232 = sand.u32 %s30, 1
        %s233 = scalar_lea.sflag [#allocation3], %s232
        %s234 = sand.u32 %s30, 1
        %s235 = smul.addr %s234, 64
        %s236 = scalar_lea.vmem [#allocation2], %s235
        %p237 = pneg %p43
        %p238 = pneg %p40
        %p239 = pneg %p64
        %p240 = pneg %p61
        %p241 = pneg %p85
        %p242 = pneg %p82
        %p243 = pneg %p106
        %p244 = pneg %p103
        %p245 = pneg %p132
        %p246 = pneg %p129
        %s247 = sand.u32 %s119, 1
        %s248 = scalar_lea.sflag [#allocation4], %s247
        %s249 = sand.u32 %s119, 1
        %s250 = smul.addr %s249, 32
        %s251 = scalar_lea.vmem [#allocation8], %s250
        %s252 = smul.u32 4, %s22
        %s253 = smul.u32 4, %s22
        %v254 = vld [vmem:[%s216] sm:$0xff]
        %v255 = vld [vmem:[%s216 + $0x8] sm:$0xff]
        %v256 = vld [vmem:[%s216 + $0x10] sm:$0xff]
        %v257 = vld [vmem:[%s216 + $0x18] sm:$0xff]
        %v258 = vld [vmem:[%s216 + $0x20] sm:$0xff]
        %v259 = vld [vmem:[%s216 + $0x28] sm:$0xff]
        %v260 = vld [vmem:[%s216 + $0x30] sm:$0xff]
        %v261 = vld [vmem:[%s216 + $0x38] sm:$0xff]
        %262 = vadd.xlane.f32.xlu0 %v254
        %v263 = vpop.xlane.xlu0 %262
        %264 = vadd.xlane.f32.xlu0 %v256
        %v265 = vpop.xlane.xlu0 %264
        %266 = vadd.xlane.f32.xlu0 %v258
        %v267 = vpop.xlane.xlu0 %266
        %268 = vadd.xlane.f32.xlu0 %v260
        %v269 = vpop.xlane.xlu0 %268
        %270 = vadd.xlane.f32.xlu0 %v255
        %v271 = vpop.xlane.xlu0 %270
        %272 = vadd.xlane.f32.xlu0 %v257
        %v273 = vpop.xlane.xlu0 %272
        %274 = vadd.xlane.f32.xlu0 %v259
        %v275 = vpop.xlane.xlu0 %274
        %276 = vadd.xlane.f32.xlu0 %v261
        %v277 = vpop.xlane.xlu0 %276
        %v278 = vadd.f32 %v263, %v271
        %v279 = vadd.f32 %v265, %v273
        %v280 = vadd.f32 %v267, %v275
        %v281 = vadd.f32 %v269, %v277
        %v282 = vmul.f32 %v254, %v254
        %v283 = vmul.f32 %v256, %v256
        %v284 = vmul.f32 %v258, %v258
        %v285 = vmul.f32 %v260, %v260
        %286 = vadd.xlane.f32.xlu0 %v282
        %v287 = vpop.xlane.xlu0 %286
        %288 = vadd.xlane.f32.xlu0 %v283
        %v289 = vpop.xlane.xlu0 %288
        %290 = vadd.xlane.f32.xlu0 %v284
        %v291 = vpop.xlane.xlu0 %290
        %292 = vadd.xlane.f32.xlu0 %v285
        %v293 = vpop.xlane.xlu0 %292
        %v294 = vmul.f32 %v255, %v255
        %v295 = vmul.f32 %v257, %v257
        %v296 = vmul.f32 %v259, %v259
        %v297 = vmul.f32 %v261, %v261
        %298 = vadd.xlane.f32.xlu0 %v294
        %v299 = vpop.xlane.xlu0 %298
        %300 = vadd.xlane.f32.xlu0 %v295
        %v301 = vpop.xlane.xlu0 %300
        %302 = vadd.xlane.f32.xlu0 %v296
        %v303 = vpop.xlane.xlu0 %302
        %304 = vadd.xlane.f32.xlu0 %v297
        %v305 = vpop.xlane.xlu0 %304
        %v306 = vadd.f32 %v287, %v299
        %v307 = vadd.f32 %v289, %v301
        %v308 = vadd.f32 %v291, %v303
        %v309 = vadd.f32 %v293, %v305
        %v310 = vmul.f32 %v278, 0.00390625
        %v311 = vmul.f32 %v279, 0.00390625
        %v312 = vmul.f32 %v280, 0.00390625
        %v313 = vmul.f32 %v281, 0.00390625
        %v314 = vmul.f32 %v306, 0.00390625
        %v315 = vmul.f32 %v307, 0.00390625
        %v316 = vmul.f32 %v308, 0.00390625
        %v317 = vmul.f32 %v309, 0.00390625
        %v318 = vmul.f32 %v310, %v310
        %v319 = vmul.f32 %v311, %v311
        %v320 = vmul.f32 %v312, %v312
        %v321 = vmul.f32 %v313, %v313
        %v322 = vsub.f32 %v314, %v318
        %v323 = vsub.f32 %v315, %v319
        %v324 = vsub.f32 %v316, %v320
        %v325 = vsub.f32 %v317, %v321
        %v326 = vmax.f32 %v322, 0.0
        %v327 = vmax.f32 %v323, 0.0
        %v328 = vmax.f32 %v324, 0.0
        %v329 = vmax.f32 %v325, 0.0
        %v330 = vadd.f32 %v326, 1e-05
        %v331 = vadd.f32 %v327, 1e-05
        %v332 = vadd.f32 %v328, 1e-05
        %v333 = vadd.f32 %v329, 1e-05
        %v334 = vrsqrt.pop %v330
        %v335 = vmul.f32 %v334, %v330
        %v336 = vmul.f32 %v335, %v334
        %v337 = vmul.f32 0.5, %v336
        %v338 = vsub.f32 1.5, %v337
        %v339 = vmul.f32 %v334, %v338
        %vm340 = vweird.f32 %v330
        %vm341 = vweird.f32 %v334
        %vm342 = vmor %vm340, %vm341
        %v343 = vsel %vm342, %v334, %v339
        %v344 = vrsqrt.pop %v331
        %v345 = vmul.f32 %v344, %v331
        %v346 = vmul.f32 %v345, %v344
        %v347 = vmul.f32 0.5, %v346
        %v348 = vsub.f32 1.5, %v347
        %v349 = vmul.f32 %v344, %v348
        %vm350 = vweird.f32 %v331
        %vm351 = vweird.f32 %v344
        %vm352 = vmor %vm350, %vm351
        %v353 = vsel %vm352, %v344, %v349
        %v354 = vrsqrt.pop %v332
        %v355 = vmul.f32 %v354, %v332
        %v356 = vmul.f32 %v355, %v354
        %v357 = vmul.f32 0.5, %v356
        %v358 = vsub.f32 1.5, %v357
        %v359 = vmul.f32 %v354, %v358
        %vm360 = vweird.f32 %v332
        %vm361 = vweird.f32 %v354
        %vm362 = vmor %vm360, %vm361
        %v363 = vsel %vm362, %v354, %v359
        %v364 = vrsqrt.pop %v333
        %v365 = vmul.f32 %v364, %v333
        %v366 = vmul.f32 %v365, %v364
        %v367 = vmul.f32 0.5, %v366
        %v368 = vsub.f32 1.5, %v367
        %v369 = vmul.f32 %v364, %v368
        %vm370 = vweird.f32 %v333
        %vm371 = vweird.f32 %v364
        %vm372 = vmor %vm370, %vm371
        %v373 = vsel %vm372, %v364, %v369
        %v374 = vsub.f32 %v254, %v310
        %v375 = vsub.f32 %v256, %v311
        %v376 = vsub.f32 %v258, %v312
        %v377 = vsub.f32 %v260, %v313
        %v378 = vmul.f32 %v374, %v343
        %v379 = vmul.f32 %v375, %v353
        %v380 = vmul.f32 %v376, %v363
        %v381 = vmul.f32 %v377, %v373
        %v382 = vsub.f32 %v255, %v310
        %v383 = vsub.f32 %v257, %v311
        %v384 = vsub.f32 %v259, %v312
        %v385 = vsub.f32 %v261, %v313
        %v386 = vmul.f32 %v382, %v343
        %v387 = vmul.f32 %v383, %v353
        %v388 = vmul.f32 %v384, %v363
        %v389 = vmul.f32 %v385, %v373
        %v390 = vld [vmem:[#allocation5] sm:$0xff]
        %v391 = vld [vmem:[#allocation5 + $0x8] sm:$0xff]
        %v392 = vld [vmem:[#allocation5 + $0x10] sm:$0xff]
        %v393 = vld [vmem:[#allocation5 + $0x18] sm:$0xff]
        %v394 = vld [vmem:[#allocation5 + $0x20] sm:$0xff]
        %v395 = vld [vmem:[#allocation5 + $0x28] sm:$0xff]
        %v396 = vld [vmem:[#allocation5 + $0x30] sm:$0xff]
        %v397 = vld [vmem:[#allocation5 + $0x38] sm:$0xff]
        %v398 = vld [vmem:[#allocation5 + $0x40] sm:$0xff]
        %v399 = vld [vmem:[#allocation5 + $0x48] sm:$0xff]
        %v400 = vld [vmem:[#allocation5 + $0x50] sm:$0xff]
        %v401 = vld [vmem:[#allocation5 + $0x58] sm:$0xff]
        %v402 = vld [vmem:[#allocation5 + $0x60] sm:$0xff]
        %v403 = vld [vmem:[#allocation5 + $0x68] sm:$0xff]
        %v404 = vld [vmem:[#allocation5 + $0x70] sm:$0xff]
        %v405 = vld [vmem:[#allocation5 + $0x78] sm:$0xff]
        %v406 = vld [vmem:[#allocation7] sm:$0xff]
        %v407 = vld [vmem:[#allocation7 + $0x8] sm:$0xff]
        %v408 = vld [vmem:[#allocation7 + $0x10] sm:$0xff]
        %v409 = vld [vmem:[#allocation7 + $0x18] sm:$0xff]
        %v410 = vld [vmem:[#allocation7 + $0x20] sm:$0xff]
        %v411 = vld [vmem:[#allocation7 + $0x28] sm:$0xff]
        %v412 = vld [vmem:[#allocation7 + $0x30] sm:$0xff]
        %v413 = vld [vmem:[#allocation7 + $0x38] sm:$0xff]
        %v414 = vld [vmem:[#allocation7 + $0x40] sm:$0xff]
        %v415 = vld [vmem:[#allocation7 + $0x48] sm:$0xff]
        %v416 = vld [vmem:[#allocation7 + $0x50] sm:$0xff]
        %v417 = vld [vmem:[#allocation7 + $0x58] sm:$0xff]
        %v418 = vld [vmem:[#allocation7 + $0x60] sm:$0xff]
        %v419 = vld [vmem:[#allocation7 + $0x68] sm:$0xff]
        %v420 = vld [vmem:[#allocation7 + $0x70] sm:$0xff]
        %v421 = vld [vmem:[#allocation7 + $0x78] sm:$0xff]
        %422 = vmatpush.msra.mxu0 %v421
        %423 = vmatpush.msra.mxu0 %v420
        %424 = vmatpush.msra.mxu0 %v419
        %425 = vmatpush.msra.mxu0 %v418
        %426 = vmatpush.msra.mxu0 %v417
        %427 = vmatpush.msra.mxu0 %v416
        %428 = vmatpush.msra.mxu0 %v415
        %429 = vmatpush.msra.mxu0 %v414
        %430 = vmatpush.msra.mxu0 %v413
        %431 = vmatpush.msra.mxu0 %v412
        %432 = vmatpush.msra.mxu0 %v411
        %433 = vmatpush.msra.mxu0 %v410
        %434 = vmatpush.msra.mxu0 %v409
        %435 = vmatpush.msra.mxu0 %v408
        %436 = vmatpush.msra.mxu0 %v407
        %437 = vmatpush.msra.mxu0 %v406
        %438 = vmatmul.f32.gmra.mxu0 %v386
        %v439 = vpop.f32.mrf.mxu0
        %v440 = vadd.f32 0.0, %v439
        %441 = vmatmul.f32.gmra.mxu0 %v387
        %v442 = vpop.f32.mrf.mxu0
        %v443 = vadd.f32 0.0, %v442
        %444 = vmatmul.f32.gmra.mxu0 %v388
        %v445 = vpop.f32.mrf.mxu0
        %v446 = vadd.f32 0.0, %v445
        %447 = vmatmul.f32.gmra.mxu0 %v389
        %v448 = vpop.f32.mrf.mxu0
        %v449 = vadd.f32 0.0, %v448
        %450 = vdwg.mxu0
        %451 = vmatpush.msra.mxu0 %v405
        %452 = vmatpush.msra.mxu0 %v404
        %453 = vmatpush.msra.mxu0 %v403
        %454 = vmatpush.msra.mxu0 %v402
        %455 = vmatpush.msra.mxu0 %v401
        %456 = vmatpush.msra.mxu0 %v400
        %457 = vmatpush.msra.mxu0 %v399
        %458 = vmatpush.msra.mxu0 %v398
        %459 = vmatpush.msra.mxu0 %v397
        %460 = vmatpush.msra.mxu0 %v396
        %461 = vmatpush.msra.mxu0 %v395
        %462 = vmatpush.msra.mxu0 %v394
        %463 = vmatpush.msra.mxu0 %v393
        %464 = vmatpush.msra.mxu0 %v392
        %465 = vmatpush.msra.mxu0 %v391
        %466 = vmatpush.msra.mxu0 %v390
        %467 = vmatmul.f32.gmra.mxu0 %v378
        %v468 = vpop.f32.mrf.mxu0
        %v469 = vadd.f32 %v440, %v468
        %470 = vmatmul.f32.gmra.mxu0 %v379
        %v471 = vpop.f32.mrf.mxu0
        %v472 = vadd.f32 %v443, %v471
        %473 = vmatmul.f32.gmra.mxu0 %v380
        %v474 = vpop.f32.mrf.mxu0
        %v475 = vadd.f32 %v446, %v474
        %476 = vmatmul.f32.gmra.mxu0 %v381
        %v477 = vpop.f32.mrf.mxu0
        %v478 = vadd.f32 %v449, %v477
        %479 = vdwg.mxu0
        %v480 = vld [vmem:[%s3] sm:$0x1]
        %v482 = vperm.slane %v480, 0
        %v484 = vadd.f32 %v469, %v482
        %v485 = vadd.f32 %v472, %v482
        %v486 = vadd.f32 %v475, %v482
        %v487 = vadd.f32 %v478, %v482
        %488 = vst [vmem:[%s251] sm:$0xff] %v484
        %489 = vst [vmem:[%s251 + $0x8] sm:$0xff] %v485
        %490 = vst [vmem:[%s251 + $0x10] sm:$0xff] %v486
        %491 = vst [vmem:[%s251 + $0x18] sm:$0xff] %v487
        %s492 = sand.u32 %s119, 1
        %s493 = scalar_lea.sflag [#allocation4], %s492
        %s494 = sand.u32 %s119, 1
        %s495 = smul.addr %s494, 32
        %s496 = scalar_lea.vmem [#allocation8], %s495
        // Predicated region
        $region49: #{tpu_custom_call.1} parent=35 // pred_check
          %p497 = pneg %p129
        $region50: #{tpu_custom_call.1} parent=35 // pred_check_branch
          %499 = sbr.rel (%p497) target = $region52
        $region51: #{tpu_custom_call.1} parent=35 // pred_region
          %s500 = smul.u32 4, %s22
          %502 = vsyncadd %s493, 0
          %s503 = smul.addr %s500, 8
          %s504 = scalar_lea.hbm %s4, %s503
          %s505 = sshll.u32 %s496, 4
          %s506 = int_to_ptr.vmem [resolvable:$true] %s505
          %s507 = sshll.u32 %s504, 4
          %s508 = int_to_ptr.hbm [resolvable:$true] %s507
          %513 = dma.vmem_to_hbm [thread:$0]  %s506, 512, %s508, %s493, 128, 128, 8
        $region52: #{tpu_custom_call.1} parent=35 // pred_fallthru
          _
      $region36: #{tpu_custom_call.1} parent=5 // pred_fallthru
        _
      %p514 = scmp.le.s32.totalorder 2, %s17
      // Predicated region
      $region53: #{tpu_custom_call.1} parent=5 // pred_check
        %p515 = pneg %p514
      $region54: #{tpu_custom_call.1} parent=5 // pred_check_branch
        %517 = sbr.rel (%p515) target = $region56
      $region55: #{tpu_custom_call.1} parent=5 // pred_region
        %s518 = ssub.s32 %s17, 2
        // Predicated region
        $region57: #{tpu_custom_call.1} parent=55 // pred_check
          %p519 = pneg %p135
        $region58: #{tpu_custom_call.1} parent=55 // pred_check_branch
          %521 = sbr.rel (%p519) target = $region60
        $region59: #{tpu_custom_call.1} parent=55 // pred_region
          %s522 = sand.u32 %s120, 1
          %s523 = scalar_lea.sflag [#allocation4], %s522
          %s524 = sand.u32 %s120, 1
          %s525 = smul.addr %s524, 32
          %s526 = scalar_lea.vmem [#allocation8], %s525
          %528 = dma.done %s523, 512
        $region60: #{tpu_custom_call.1} parent=55 // pred_fallthru
          _
      $region56: #{tpu_custom_call.1} parent=5 // pred_fallthru
        _
    $region6: #{tpu_custom_call.1} parent=1 // loop_footer
      %s21 = sadd.s32 1, %s17
    $region7: #{tpu_custom_call.1} parent=1 // loop_footer_branch
      %16 = sbr.rel target = $region3
    $region8: #{tpu_custom_call.1} parent=1 // loop_exit
      _
    %529 = vsyncpa [#allocation3], 1
    %s530 = scalar_lea.sflag [#allocation3], 1
    %531 = vsyncpa %s530, 1
    %532 = vsyncpa [#allocation6], 1
    %533 = vsyncpa [#allocation4], 1
    %s534 = scalar_lea.sflag [#allocation4], 1
    %535 = vsyncpa %s534, 1

</llo_original>
